<compile_context>
chip_gen: v6e
topology: v6e:2x2x1
jax: 0.10.0
libtpu: 0.0.40
codegen_flags: <defaults>
</compile_context>

<pallas_src>
import functools

import jax
import jax.numpy as jnp
from jax.experimental import pallas as pl
from jax.experimental.pallas import tpu as pltpu

LANE = 128
SUBLANE = 8
MAX_BLOCK_ROWS = 512        # rows per grid step for large inputs (f32 tile <= 256 KiB)


# ------------------------------ kernel --------------------------------------
def _sharp_sum_kernel(inv_n, x_ref, t_ref, o_ref):
    i = pl.program_id(0)

    @pl.when(i == 0)
    def _():
        o_ref[...] = jnp.zeros_like(o_ref)

    d = jnp.abs(x_ref[...] - t_ref[...])
    # where(d < 0.5, d, d*d + 0.25)  ==  d*underth + (d*d + 0.25)*(1 - underth)
    elem = jnp.where(d < 0.5, d, d * d + 0.25)
    o_ref[...] += jnp.sum(elem, keepdims=True)

    @pl.when(i == pl.num_programs(0) - 1)
    def _():
        o_ref[...] = o_ref[...] * inv_n          # fold mean's 1/N into the kernel


# ------------------------------ wrapper --------------------------------------
def sharp_mse_loss(pred, target):
    assert pred.shape == target.shape, (pred.shape, target.shape)
    n = int(pred.size)                           # static under jit

    xf = pred.reshape(-1).astype(jnp.float32)
    tf = target.reshape(-1).astype(jnp.float32)

    # Pad flat length to a multiple of (8, 128) tile size.  Both operands are
    # padded with zeros -> |0 - 0| = 0 contributes 0 to the sum.
    chunk = SUBLANE * LANE
    padded = pl.cdiv(n, chunk) * chunk
    if padded != n:
        xf = jnp.pad(xf, (0, padded - n))
        tf = jnp.pad(tf, (0, padded - n))
    rows = padded // LANE

    if rows <= MAX_BLOCK_ROWS:
        block_rows, grid = rows, 1
    else:
        block_rows = MAX_BLOCK_ROWS
        rows_p = pl.cdiv(rows, block_rows) * block_rows
        if rows_p != rows:
            extra = (rows_p - rows) * LANE
            xf = jnp.pad(xf, (0, extra))
            tf = jnp.pad(tf, (0, extra))
            rows = rows_p
        grid = rows // block_rows

    x2 = xf.reshape(rows, LANE)                  # lane-dense, no transposes
    t2 = tf.reshape(rows, LANE)

    out = pl.pallas_call(
        functools.partial(_sharp_sum_kernel, float(1.0 / n)),
        out_shape=jax.ShapeDtypeStruct((1, 1), jnp.float32),
        grid=(grid,),
        in_specs=[pl.BlockSpec((block_rows, LANE), lambda i: (i, 0)),
                  pl.BlockSpec((block_rows, LANE), lambda i: (i, 0))],
        # constant index_map over the reduction axis -> accumulator stays
        # resident in VMEM across all grid steps, written to HBM once.
        out_specs=pl.BlockSpec((1, 1), lambda i: (0, 0)),
        compiler_params=pltpu.CompilerParams(
            dimension_semantics=("arbitrary",)),
    )(x2, t2)
    return out[0, 0]


# -------------------------------- main ---------------------------------------
if __name__ == "__main__":
    key = jax.random.PRNGKey(0)
    k1, k2 = jax.random.split(key)
    shape = (2, 4, 16, 16)                       # batch=2, channels=4, spatial=16
    x = jax.random.normal(k1, shape, jnp.float32)
    t = jax.random.normal(k2, shape, jnp.float32)

    loss_fn = jax.jit(sharp_mse_loss)
    loss = jax.block_until_ready(loss_fn(x, t))

    # pure-JAX reference of the same forward semantics
    d = jnp.abs(x - t)
    ref = jnp.mean(jnp.where(d < 0.5, d, d * d + 0.25))

    assert loss.shape == (), loss.shape
    assert bool(jnp.isfinite(loss))
    assert bool(jnp.allclose(loss, ref, rtol=1e-5, atol=1e-6)), (float(loss), float(ref))
    print("KERNEL_OK")
</pallas_src>

<mosaic_0001>
module attributes {stable_mosaic.version = 11 : i64} {
  func.func @_sharp_sum_kernel(%arg0: i32, %arg1: memref<16x128xf32, #tpu.memory_space<vmem>>, %arg2: memref<16x128xf32, #tpu.memory_space<vmem>>, %arg3: memref<1x1xf32, #tpu.memory_space<vmem>>) attributes {dimension_semantics = [#tpu.dimension_semantics<arbitrary>], iteration_bounds = array<i64: 1>, scalar_prefetch = 0 : i64, scratch_operands = 0 : i64, tpu.core_type = #tpu.core_type<tc>, window_params = [{transform_indices = @transform_0, window_bounds = array<i64: 16, 128>}, {transform_indices = @transform_1, window_bounds = array<i64: 16, 128>}, {pipeline_mode = #tpu.pipeline_mode<synchronous>, transform_indices = @transform_2, window_bounds = array<i64: 1, 1>}]} {
    %c0_i32 = arith.constant 0 : i32
    %0 = arith.cmpi eq, %arg0, %c0_i32 : i32
    %1 = arith.extui %0 : i1 to i32
    %c0_i32_0 = arith.constant 0 : i32
    %2 = arith.cmpi ne, %1, %c0_i32_0 : i32
    scf.if %2 {
      %cst_12 = arith.constant 0.000000e+00 : f32
      %24 = vector.broadcast %cst_12 : f32 to vector<1x1xf32>
      %c0_13 = arith.constant 0 : index
      %c0_14 = arith.constant 0 : index
      %25 = vector.load %arg3[%c0_13, %c0_14] : memref<1x1xf32, #tpu.memory_space<vmem>>, vector<1x1xf32>
      tpu.vector_store %arg3[%c0_13, %c0_14], %24 {strides = array<i32>} : memref<1x1xf32, #tpu.memory_space<vmem>>, vector<1x1xf32>,
    } else {
    }
    %c0 = arith.constant 0 : index
    %c0_1 = arith.constant 0 : index
    %3 = vector.load %arg1[%c0, %c0_1] : memref<16x128xf32, #tpu.memory_space<vmem>>, vector<16x128xf32>
    %c0_2 = arith.constant 0 : index
    %c0_3 = arith.constant 0 : index
    %4 = vector.load %arg2[%c0_2, %c0_3] : memref<16x128xf32, #tpu.memory_space<vmem>>, vector<16x128xf32>
    %5 = arith.subf %3, %4 : vector<16x128xf32>
    %6 = math.absf %5 : vector<16x128xf32>
    %cst = arith.constant 5.000000e-01 : f32
    %7 = vector.broadcast %cst : f32 to vector<16x128xf32>
    %8 = arith.cmpf olt, %6, %7 : vector<16x128xf32>
    %9 = arith.mulf %6, %6 : vector<16x128xf32>
    %cst_4 = arith.constant 2.500000e-01 : f32
    %10 = vector.broadcast %cst_4 : f32 to vector<16x128xf32>
    %11 = arith.addf %9, %10 : vector<16x128xf32>
    %12 = arith.select %8, %6, %11 : vector<16x128xi1>, vector<16x128xf32>
    %c0_5 = arith.constant 0 : index
    %c0_6 = arith.constant 0 : index
    %13 = vector.load %arg3[%c0_5, %c0_6] : memref<1x1xf32, #tpu.memory_space<vmem>>, vector<1x1xf32>
    %14 = vector.shape_cast %12 : vector<16x128xf32> to vector<1x16x128xf32>
    %cst_7 = arith.constant dense<0.000000e+00> : vector<1xf32>
    %15 = vector.multi_reduction <add>, %14, %cst_7 [1, 2] : vector<1x16x128xf32> to vector<1xf32>
    %16 = vector.shape_cast %15 : vector<1xf32> to vector<1x1x1xf32>
    %17 = vector.extract %16[0, 0, 0] : f32 from vector<1x1x1xf32>
    %18 = vector.broadcast %17 : f32 to vector<1x1xf32>
    %19 = arith.addf %13, %18 : vector<1x1xf32>
    %c0_8 = arith.constant 0 : index
    %c0_9 = arith.constant 0 : index
    %20 = vector.load %arg3[%c0_8, %c0_9] : memref<1x1xf32, #tpu.memory_space<vmem>>, vector<1x1xf32>
    tpu.vector_store %arg3[%c0_8, %c0_9], %19 {strides = array<i32>} : memref<1x1xf32, #tpu.memory_space<vmem>>, vector<1x1xf32>,
    %c0_i32_10 = arith.constant 0 : i32
    %21 = arith.cmpi eq, %arg0, %c0_i32_10 : i32
    %22 = arith.extui %21 : i1 to i32
    %c0_i32_11 = arith.constant 0 : i32
    %23 = arith.cmpi ne, %22, %c0_i32_11 : i32
    scf.if %23 {
      %c0_12 = arith.constant 0 : index
      %c0_13 = arith.constant 0 : index
      %24 = vector.load %arg3[%c0_12, %c0_13] : memref<1x1xf32, #tpu.memory_space<vmem>>, vector<1x1xf32>
      %cst_14 = arith.constant 4.8828125E-4 : f32
      %25 = vector.broadcast %cst_14 : f32 to vector<1x1xf32>
      %26 = arith.mulf %24, %25 : vector<1x1xf32>
      %c0_15 = arith.constant 0 : index
      %c0_16 = arith.constant 0 : index
      %27 = vector.load %arg3[%c0_15, %c0_16] : memref<1x1xf32, #tpu.memory_space<vmem>>, vector<1x1xf32>
      tpu.vector_store %arg3[%c0_15, %c0_16], %26 {strides = array<i32>} : memref<1x1xf32, #tpu.memory_space<vmem>>, vector<1x1xf32>,
    } else {
    }
    return
  }
  func.func @transform_0(%arg0: i32) -> (i32, i32) {
    %c0_i32 = arith.constant 0 : i32
    %c0_i32_0 = arith.constant 0 : i32
    return %arg0, %c0_i32 : i32, i32
  }
  func.func @transform_1(%arg0: i32) -> (i32, i32) {
    %c0_i32 = arith.constant 0 : i32
    %c0_i32_0 = arith.constant 0 : i32
    return %arg0, %c0_i32 : i32, i32
  }
  func.func @transform_2(%arg0: i32) -> (i32, i32) {
    %c0_i32 = arith.constant 0 : i32
    %c0_i32_0 = arith.constant 0 : i32
    %c0_i32_1 = arith.constant 0 : i32
    return %c0_i32, %c0_i32_0 : i32, i32
  }
}

</mosaic_0001>

<llo_original>
// kernel: sharp_mse_loss.1
$region0: #{sharp_mse_loss.1}
  #allocation0 [shape = 'u32[]', space=smem, size = 0x4, offset = 0x4, fixed_abs, tag = 'smem constant byte address 0x4 - core index']
  #allocation1 [shape = 'u32[144,128]{1,0:T(1,128)}', space=vmem, size = 0x12000, scoped, tag = 'internal scratch']
  %s0 = inlined_call_operand.vmem [shape: f32[16,128], index: 0, kind: input, shape index: {}]
  %s1 = inlined_call_operand.vmem [shape: f32[16,128], index: 1, kind: input, shape index: {}]
  %s2 = inlined_call_operand.hbm [shape: f32[1,1], index: 2, kind: output, shape index: {}]
  %s3 = sld [smem:[#allocation0]]
  $region26: #{sharp_mse_loss.1} parent=0
    _
  %s5 = ssub.s32 1, %s3
  %s6 = scalar_select 0, %s5, %s3
  $region1: #{sharp_mse_loss.1} parent=0
    #allocation2 [shape = 'u8[512]{0}', space=vmem, size = 0x400, scoped, tag = 'output window, operand 0, single buffered']
    #allocation3 [shape = 's32[1]{0}', space=sflag, size = 0x4, scoped, tag = 'scoped memory for sharp_mse_loss.1']
    %7 = vsyncpa [#allocation3], 0
    // Predicated region
    $region2: #{sharp_mse_loss.1} parent=1 // pred_check
      _
    $region3: #{sharp_mse_loss.1} parent=1 // pred_check_branch
      %9 = sbr.rel (0) target = $region5
    $region4: #{sharp_mse_loss.1} parent=1 // pred_region
      _
    $region5: #{sharp_mse_loss.1} parent=1 // pred_fallthru
      _
    // Predicated region
    $region6: #{sharp_mse_loss.1} parent=1 // pred_check
      _
    $region7: #{sharp_mse_loss.1} parent=1 // pred_check_branch
      %11 = sbr.rel (0) target = $region9
    $region8: #{sharp_mse_loss.1} parent=1 // pred_region
      _
    $region9: #{sharp_mse_loss.1} parent=1 // pred_fallthru
      _
    %p12 = scmp.eq.s32.totalorder 0, 0
    // Predicated region
    $region10: #{sharp_mse_loss.1} parent=1 // pred_check
      %p13 = pneg %p12
    $region11: #{sharp_mse_loss.1} parent=1 // pred_check_branch
      %15 = sbr.rel (%p13) target = $region13
    $region12: #{sharp_mse_loss.1} parent=1 // pred_region
      %vm16 = vcmask 0
      %17 = vst.msk [vmem:[#allocation2] sm:$0x1] %vm16, 0.0
    $region13: #{sharp_mse_loss.1} parent=1 // pred_fallthru
      _
    %v18 = vld [vmem:[%s0] sm:$0xff]
    %v19 = vld [vmem:[%s0 + $0x8] sm:$0xff]
    %v20 = vld [vmem:[%s1] sm:$0xff]
    %v21 = vld [vmem:[%s1 + $0x8] sm:$0xff]
    %v22 = vsub.f32 %v18, %v20
    %v23 = vsub.f32 %v19, %v21
    %v24 = vand.u32 2147483647, %v22
    %v25 = vand.u32 2147483647, %v23
    %vm26 = vcmp.lt.f32.partialorder %v24, 0.5
    %vm27 = vcmp.lt.f32.partialorder %v25, 0.5
    %v28 = vmul.f32 %v24, %v24
    %v29 = vmul.f32 %v25, %v25
    %v30 = vadd.f32 %v28, 0.25
    %v31 = vadd.f32 %v29, 0.25
    %v32 = vsel %vm26, %v24, %v30
    %v33 = vsel %vm27, %v25, %v31
    %v34 = vld [vmem:[#allocation2] sm:$0x1]
    %v35 = vadd.f32 %v32, %v33
    %36 = vadd.xlane.f32.xlu0 %v35
    %v37 = vpop.xlane.xlu0 %36
    %v38 = vrot.slane %v37, 4
    %v39 = vadd.f32 %v37, %v38
    %v40 = vrot.slane %v39, 2
    %v41 = vadd.f32 %v39, %v40
    %v42 = vrot.slane %v41, 1
    %v43 = vadd.f32 %v41, %v42
    %s44 = vtos %v43
    %v45 = vstv %s44
    %v46 = vadd.f32 %v34, %v45
    %vm47 = vcmask 0
    %48 = vst.msk [vmem:[#allocation2] sm:$0x1] %vm47, %v46
    // Predicated region
    $region14: #{sharp_mse_loss.1} parent=1 // pred_check
      %p49 = pneg %p12
    $region15: #{sharp_mse_loss.1} parent=1 // pred_check_branch
      %51 = sbr.rel (%p49) target = $region17
    $region16: #{sharp_mse_loss.1} parent=1 // pred_region
      %v52 = vld [vmem:[#allocation2] sm:$0x1]
      %v53 = vmul.f32 %v52, 0.00048828125
      %54 = vst.msk [vmem:[#allocation2] sm:$0x1] %vm47, %v53
    $region17: #{sharp_mse_loss.1} parent=1 // pred_fallthru
      _
    // Predicated region
    $region18: #{sharp_mse_loss.1} parent=1 // pred_check
      _
    $region19: #{sharp_mse_loss.1} parent=1 // pred_check_branch
      %56 = sbr.rel (0) target = $region21
    $region20: #{sharp_mse_loss.1} parent=1 // pred_region
      %s58 = ssub.s32 16, 16
      %59 = vsyncadd [#allocation3], %s58
      %s61 = sshll.u32 [#allocation2], 4
      %s62 = int_to_ptr.vmem [resolvable:$true] %s61
      %64 = dma.vmem_to_hbm [thread:$0]  %s62, 16, %s2, [#allocation3]
    $region21: #{sharp_mse_loss.1} parent=1 // pred_fallthru
      _
    // Predicated region
    $region22: #{sharp_mse_loss.1} parent=1 // pred_check
      _
    $region23: #{sharp_mse_loss.1} parent=1 // pred_check_branch
      %66 = sbr.rel (0) target = $region25
    $region24: #{sharp_mse_loss.1} parent=1 // pred_region
      %67 = dma.done [#allocation3], 16
    $region25: #{sharp_mse_loss.1} parent=1 // pred_fallthru
      _
    %68 = vsyncpa [#allocation3], 1

</llo_original>
